<compile_context>
chip_gen: v7x
topology: tpu7x:2x2x1
jax: 0.10.0
libtpu: 0.0.40
codegen_flags: <defaults>
</compile_context>

<pallas_src>
import functools

import jax
import jax.numpy as jnp
from jax.experimental import pallas as pl
from jax.experimental.pallas import tpu as pltpu

HIDDEN = 128  # padded feature width used for every layer inside the kernel


def _round_up(x, m):
    return (x + m - 1) // m * m


# ----------------------------- Pallas kernel --------------------------------
def _deepq_kernel(tiles_ref, inv_ref, rep_ref, pat_ref,
                  w1e_ref, w1i_ref, b1_ref, ws_ref, bs_ref, out_ref):
    """Fused embedding-lookup + 5-layer MLP for one batch tile.

    tiles_rep[b, j] = tiles[b, j // C]    (constant 0/1 matmul, exact in f32)
    onehot[b, j]    = (tiles_rep[b, j] == j % C)
    layer1          = relu(onehot @ w1e + inv @ w1i + b1)   (embedding folded
                      into w1e at setup time, inventory part split off so no
                      concat is ever materialized)
    """
    f32 = jnp.float32
    tiles_f = tiles_ref[...].astype(f32)                                   # [TB, T]
    tiles_rep = jnp.dot(tiles_f, rep_ref[...], preferred_element_type=f32)  # [TB, KP]
    onehot = (tiles_rep == pat_ref[...]).astype(f32)                        # [TB, KP]

    # Layer 1: folded-embedding part + inventory part + bias, ReLU.
    h = jnp.dot(onehot, w1e_ref[...], preferred_element_type=f32)
    h = h + jnp.dot(inv_ref[...], w1i_ref[...], preferred_element_type=f32)
    h = jnp.maximum(h + b1_ref[...], 0.0)

    # Layers 2-4 (ReLU) and layer 5 (linear), all padded to 128x128 tiles.
    for layer in range(3):
        h = jnp.maximum(
            jnp.dot(h, ws_ref[layer], preferred_element_type=f32) + bs_ref[layer],
            0.0)
    out_ref[...] = jnp.dot(h, ws_ref[3], preferred_element_type=f32) + bs_ref[3]


# ----------------------------- Wrapper ---------------------------------------
@functools.partial(jax.jit, static_argnames=("n_actions",))
def deepq_forward(tiles, inventories, fused, *, n_actions):
    """tiles: [B, n_tiles] int32, inventories: [B, inv_dim] f32."""
    rep, pattern, w1e, w1i, b1, ws, bs = fused
    b_orig, n_tiles = tiles.shape
    inv_dim = inventories.shape[1]

    # Batch tiling: stream activation tiles, keep weights VMEM-resident.
    tb = min(64, _round_up(b_orig, 8))
    bp = _round_up(b_orig, tb)
    if bp != b_orig:
        tiles = jnp.pad(tiles, ((0, bp - b_orig), (0, 0)))
        inventories = jnp.pad(inventories, ((0, bp - b_orig), (0, 0)))

    batch_spec = lambda cols: pl.BlockSpec((tb, cols), lambda i: (i, 0))
    const2 = lambda shape: pl.BlockSpec(shape, lambda i: (0, 0))
    const3 = lambda shape: pl.BlockSpec(shape, lambda i: (0, 0, 0))

    out = pl.pallas_call(
        _deepq_kernel,
        out_shape=jax.ShapeDtypeStruct((bp, HIDDEN), jnp.float32),
        grid_spec=pltpu.PrefetchScalarGridSpec(
            num_scalar_prefetch=0,
            grid=(bp // tb,),
            in_specs=[
                batch_spec(n_tiles),      # tiles    [TB, T] int32
                batch_spec(inv_dim),      # inv      [TB, inv_dim]
                const2(rep.shape),        # rep      [T, KP]   (constant)
                const2(pattern.shape),    # pattern  [1, KP]   (constant)
                const2(w1e.shape),        # w1e      [KP, 128]
                const2(w1i.shape),        # w1i      [inv_dim, 128]
                const2(b1.shape),         # b1       [1, 128]
                const3(ws.shape),         # ws       [4, 128, 128]
                const3(bs.shape),         # bs       [4, 1, 128]
            ],
            out_specs=pl.BlockSpec((tb, HIDDEN), lambda i: (i, 0)),
        ),
        compiler_params=pltpu.CompilerParams(
            dimension_semantics=("parallel",)),   # v7x: shard batch over both TCs
    )(tiles, inventories, rep, pattern, w1e, w1i, b1, ws, bs)

    return out[:b_orig, :n_actions]


# ----------------------------- Parameters ------------------------------------
def make_params(key, num_tile_types, embed_dim, n_tiles, inv_dim, n_actions):
    """Original (PyTorch-shaped) parameters: embedding table + 5 linears.
    Weights are stored [in, out] so y = x @ W + b matches y = x @ W_pt.T + b."""
    input_size = embed_dim * n_tiles + inv_dim
    sizes = [(input_size, 128), (128, 128), (128, 64), (64, 32), (32, n_actions)]
    keys = jax.random.split(key, 1 + 2 * len(sizes))
    embed_table = 0.1 * jax.random.normal(
        keys[0], (num_tile_types, embed_dim), dtype=jnp.float32)
    params = []
    for i, (fan_in, fan_out) in enumerate(sizes):
        wk, bk = keys[1 + 2 * i], keys[2 + 2 * i]
        scale = 1.0 / jnp.sqrt(jnp.float32(fan_in))
        w = jax.random.uniform(wk, (fan_in, fan_out), jnp.float32, -scale, scale)
        b = jax.random.uniform(bk, (fan_out,), jnp.float32, -scale, scale)
        params += [w, b]
    return embed_table, params


def fold_params(embed_table, params, *, n_tiles, embed_dim, inv_dim, num_tile_types):
    """Fold the embedding table into layer 1 and pad everything lane-dense.
    Done once at setup; the result is what the Pallas kernel consumes."""
    w1, b1, w2, b2, w3, b3, w4, b4, w5, b5 = params
    c = num_tile_types
    kp = _round_up(n_tiles * c, 128)

    # Fold: w1e[t*C + ct, :] = embed_table[ct, :] @ w1[t*E:(t+1)*E, :]
    w1_emb = w1[: n_tiles * embed_dim, :].reshape(n_tiles, embed_dim, HIDDEN)
    w1e = jnp.einsum("ce,teo->tco", embed_table, w1_emb).reshape(n_tiles * c, HIDDEN)
    w1e = jnp.pad(w1e, ((0, kp - n_tiles * c), (0, 0)))          # zero K padding
    w1i = w1[n_tiles * embed_dim:, :]                            # [inv_dim, 128]
    b1p = b1.reshape(1, HIDDEN)

    # Constant helpers for the in-kernel flat one-hot.
    cols = jnp.arange(kp)
    rep = (cols[None, :] // c == jnp.arange(n_tiles)[:, None]).astype(jnp.float32)
    pattern = jnp.where(cols < n_tiles * c, cols % c, -1).astype(jnp.float32)[None, :]

    def pad_w(w):
        return jnp.pad(w, ((0, HIDDEN - w.shape[0]), (0, HIDDEN - w.shape[1])))

    def pad_b(b):
        return jnp.pad(b, (0, HIDDEN - b.shape[0])).reshape(1, HIDDEN)

    ws = jnp.stack([pad_w(w2), pad_w(w3), pad_w(w4), pad_w(w5)])   # [4, 128, 128]
    bs = jnp.stack([pad_b(b2), pad_b(b3), pad_b(b4), pad_b(b5)])   # [4, 1, 128]
    return (rep, pattern, w1e, w1i, b1p, ws, bs)


# ----------------------------- Reference (pure JAX) ---------------------------
def deepq_forward_ref(tiles, inventories, embed_table, params):
    emb = jnp.take(embed_table, tiles, axis=0)
    x = jnp.concatenate([emb.reshape(emb.shape[0], -1), inventories], axis=1)
    w1, b1, w2, b2, w3, b3, w4, b4, w5, b5 = params
    x = jnp.maximum(x @ w1 + b1, 0.0)
    x = jnp.maximum(x @ w2 + b2, 0.0)
    x = jnp.maximum(x @ w3 + b3, 0.0)
    x = jnp.maximum(x @ w4 + b4, 0.0)
    return x @ w5 + b5


if __name__ == "__main__":
    # Small config consistent with the module:
    #   vision_range = 2 -> (2*2+1)^2 = 25 tiles, embedding_dim = 4,
    #   inventory size = 4, num tile types = 8, 6 actions -> input_size = 104.
    batch = 8
    vision_range = 2
    n_tiles = (vision_range * 2 + 1) ** 2
    embed_dim = 4
    inv_dim = 4
    num_tile_types = 8
    n_actions = 6

    root = jax.random.PRNGKey(0)
    k_param, k_tiles, k_inv = jax.random.split(root, 3)

    embed_table, params = make_params(
        k_param, num_tile_types, embed_dim, n_tiles, inv_dim, n_actions)
    fused = fold_params(embed_table, params, n_tiles=n_tiles, embed_dim=embed_dim,
                        inv_dim=inv_dim, num_tile_types=num_tile_types)

    tiles = jax.random.randint(k_tiles, (batch, n_tiles), 0, num_tile_types,
                               dtype=jnp.int32)
    inventories = jax.random.uniform(k_inv, (batch, inv_dim), dtype=jnp.float32)

    out = deepq_forward(tiles, inventories, fused, n_actions=n_actions)
    out = jax.block_until_ready(out)

    ref = deepq_forward_ref(tiles, inventories, embed_table, params)
    assert out.shape == (batch, n_actions), out.shape
    assert jnp.allclose(out, ref, atol=1e-4, rtol=1e-4), \
        float(jnp.max(jnp.abs(out - ref)))

    print("KERNEL_OK")
</pallas_src>

<mosaic_0001>
module attributes {stable_mosaic.version = 11 : i64} {
  func.func @_deepq_kernel(%arg0: i32, %arg1: memref<8x25xi32, #tpu.memory_space<vmem>>, %arg2: memref<8x4xf32, #tpu.memory_space<vmem>>, %arg3: memref<25x256xf32, #tpu.memory_space<vmem>>, %arg4: memref<1x256xf32, #tpu.memory_space<vmem>>, %arg5: memref<256x128xf32, #tpu.memory_space<vmem>>, %arg6: memref<4x128xf32, #tpu.memory_space<vmem>>, %arg7: memref<1x128xf32, #tpu.memory_space<vmem>>, %arg8: memref<4x128x128xf32, #tpu.memory_space<vmem>>, %arg9: memref<4x1x128xf32, #tpu.memory_space<vmem>>, %arg10: memref<8x128xf32, #tpu.memory_space<vmem>>) attributes {dimension_semantics = [#tpu.dimension_semantics<parallel>], iteration_bounds = array<i64: 1>, scalar_prefetch = 0 : i64, scratch_operands = 0 : i64, tpu.core_type = #tpu.core_type<tc>, window_params = [{transform_indices = @transform_0, window_bounds = array<i64: 8, 25>}, {transform_indices = @transform_1, window_bounds = array<i64: 8, 4>}, {pipeline_mode = #tpu.pipeline_mode<synchronous>, transform_indices = @transform_2, window_bounds = array<i64: 25, 256>}, {pipeline_mode = #tpu.pipeline_mode<synchronous>, transform_indices = @transform_3, window_bounds = array<i64: 1, 256>}, {pipeline_mode = #tpu.pipeline_mode<synchronous>, transform_indices = @transform_4, window_bounds = array<i64: 256, 128>}, {pipeline_mode = #tpu.pipeline_mode<synchronous>, transform_indices = @transform_5, window_bounds = array<i64: 4, 128>}, {pipeline_mode = #tpu.pipeline_mode<synchronous>, transform_indices = @transform_6, window_bounds = array<i64: 1, 128>}, {pipeline_mode = #tpu.pipeline_mode<synchronous>, transform_indices = @transform_7, window_bounds = array<i64: 4, 128, 128>}, {pipeline_mode = #tpu.pipeline_mode<synchronous>, transform_indices = @transform_8, window_bounds = array<i64: 4, 1, 128>}, {transform_indices = @transform_9, window_bounds = array<i64: 8, 128>}]} {
    %c0 = arith.constant 0 : index
    %c0_0 = arith.constant 0 : index
    %0 = vector.load %arg1[%c0, %c0_0] : memref<8x25xi32, #tpu.memory_space<vmem>>, vector<8x25xi32>
    %1 = arith.sitofp %0 : vector<8x25xi32> to vector<8x25xf32>
    %c0_1 = arith.constant 0 : index
    %c0_2 = arith.constant 0 : index
    %2 = vector.load %arg3[%c0_1, %c0_2] : memref<25x256xf32, #tpu.memory_space<vmem>>, vector<25x256xf32>
    %cst = arith.constant dense<0.000000e+00> : vector<8x256xf32>
    %3 = tpu.matmul %1, %2, %cst {dimension_numbers = #tpu.dot_dimension_numbers<[1], [0], [0], [1], [0, 0, 1, 1], [], []>} : vector<8x25xf32>, vector<25x256xf32>, vector<8x256xf32> -> vector<8x256xf32>
    %c0_3 = arith.constant 0 : index
    %c0_4 = arith.constant 0 : index
    %4 = vector.load %arg4[%c0_3, %c0_4] : memref<1x256xf32, #tpu.memory_space<vmem>>, vector<1x256xf32>
    %5 = vector.broadcast %4 : vector<1x256xf32> to vector<8x256xf32>
    %6 = arith.cmpf oeq, %3, %5 : vector<8x256xf32>
    %7 = arith.extui %6 : vector<8x256xi1> to vector<8x256xi32>
    %8 = arith.sitofp %7 : vector<8x256xi32> to vector<8x256xf32>
    %c0_5 = arith.constant 0 : index
    %c0_6 = arith.constant 0 : index
    %9 = vector.load %arg5[%c0_5, %c0_6] : memref<256x128xf32, #tpu.memory_space<vmem>>, vector<256x128xf32>
    %cst_7 = arith.constant dense<0.000000e+00> : vector<8x128xf32>
    %10 = tpu.matmul %8, %9, %cst_7 {dimension_numbers = #tpu.dot_dimension_numbers<[1], [0], [0], [1], [0, 0, 1, 1], [], []>} : vector<8x256xf32>, vector<256x128xf32>, vector<8x128xf32> -> vector<8x128xf32>
    %c0_8 = arith.constant 0 : index
    %c0_9 = arith.constant 0 : index
    %11 = vector.load %arg2[%c0_8, %c0_9] : memref<8x4xf32, #tpu.memory_space<vmem>>, vector<8x4xf32>
    %c0_10 = arith.constant 0 : index
    %c0_11 = arith.constant 0 : index
    %12 = vector.load %arg6[%c0_10, %c0_11] : memref<4x128xf32, #tpu.memory_space<vmem>>, vector<4x128xf32>
    %cst_12 = arith.constant dense<0.000000e+00> : vector<8x128xf32>
    %13 = tpu.matmul %11, %12, %cst_12 {dimension_numbers = #tpu.dot_dimension_numbers<[1], [0], [0], [1], [0, 0, 1, 1], [], []>} : vector<8x4xf32>, vector<4x128xf32>, vector<8x128xf32> -> vector<8x128xf32>
    %14 = arith.addf %10, %13 : vector<8x128xf32>
    %c0_13 = arith.constant 0 : index
    %c0_14 = arith.constant 0 : index
    %15 = vector.load %arg7[%c0_13, %c0_14] : memref<1x128xf32, #tpu.memory_space<vmem>>, vector<1x128xf32>
    %16 = vector.broadcast %15 : vector<1x128xf32> to vector<8x128xf32>
    %17 = arith.addf %14, %16 : vector<8x128xf32>
    %cst_15 = arith.constant 0.000000e+00 : f32
    %18 = vector.broadcast %cst_15 : f32 to vector<8x128xf32>
    %19 = arith.maximumf %17, %18 : vector<8x128xf32>
    %c0_16 = arith.constant 0 : index
    %c0_17 = arith.constant 0 : index
    %c0_18 = arith.constant 0 : index
    %20 = vector.load %arg8[%c0_16, %c0_17, %c0_18] : memref<4x128x128xf32, #tpu.memory_space<vmem>>, vector<1x128x128xf32>
    %21 = vector.shape_cast %20 : vector<1x128x128xf32> to vector<128x128xf32>
    %cst_19 = arith.constant dense<0.000000e+00> : vector<8x128xf32>
    %22 = tpu.matmul %19, %21, %cst_19 {dimension_numbers = #tpu.dot_dimension_numbers<[1], [0], [0], [1], [0, 0, 1, 1], [], []>} : vector<8x128xf32>, vector<128x128xf32>, vector<8x128xf32> -> vector<8x128xf32>
    %c0_20 = arith.constant 0 : index
    %c0_21 = arith.constant 0 : index
    %c0_22 = arith.constant 0 : index
    %23 = vector.load %arg9[%c0_20, %c0_21, %c0_22] : memref<4x1x128xf32, #tpu.memory_space<vmem>>, vector<1x1x128xf32>
    %24 = vector.shape_cast %23 : vector<1x1x128xf32> to vector<1x128xf32>
    %25 = vector.broadcast %24 : vector<1x128xf32> to vector<8x128xf32>
    %26 = arith.addf %22, %25 : vector<8x128xf32>
    %cst_23 = arith.constant 0.000000e+00 : f32
    %27 = vector.broadcast %cst_23 : f32 to vector<8x128xf32>
    %28 = arith.maximumf %26, %27 : vector<8x128xf32>
    %c1 = arith.constant 1 : index
    %c0_24 = arith.constant 0 : index
    %c0_25 = arith.constant 0 : index
    %29 = vector.load %arg8[%c1, %c0_24, %c0_25] : memref<4x128x128xf32, #tpu.memory_space<vmem>>, vector<1x128x128xf32>
    %30 = vector.shape_cast %29 : vector<1x128x128xf32> to vector<128x128xf32>
    %cst_26 = arith.constant dense<0.000000e+00> : vector<8x128xf32>
    %31 = tpu.matmul %28, %30, %cst_26 {dimension_numbers = #tpu.dot_dimension_numbers<[1], [0], [0], [1], [0, 0, 1, 1], [], []>} : vector<8x128xf32>, vector<128x128xf32>, vector<8x128xf32> -> vector<8x128xf32>
    %c1_27 = arith.constant 1 : index
    %c0_28 = arith.constant 0 : index
    %c0_29 = arith.constant 0 : index
    %32 = vector.load %arg9[%c1_27, %c0_28, %c0_29] : memref<4x1x128xf32, #tpu.memory_space<vmem>>, vector<1x1x128xf32>
    %33 = vector.shape_cast %32 : vector<1x1x128xf32> to vector<1x128xf32>
    %34 = vector.broadcast %33 : vector<1x128xf32> to vector<8x128xf32>
    %35 = arith.addf %31, %34 : vector<8x128xf32>
    %cst_30 = arith.constant 0.000000e+00 : f32
    %36 = vector.broadcast %cst_30 : f32 to vector<8x128xf32>
    %37 = arith.maximumf %35, %36 : vector<8x128xf32>
    %c2 = arith.constant 2 : index
    %c0_31 = arith.constant 0 : index
    %c0_32 = arith.constant 0 : index
    %38 = vector.load %arg8[%c2, %c0_31, %c0_32] : memref<4x128x128xf32, #tpu.memory_space<vmem>>, vector<1x128x128xf32>
    %39 = vector.shape_cast %38 : vector<1x128x128xf32> to vector<128x128xf32>
    %cst_33 = arith.constant dense<0.000000e+00> : vector<8x128xf32>
    %40 = tpu.matmul %37, %39, %cst_33 {dimension_numbers = #tpu.dot_dimension_numbers<[1], [0], [0], [1], [0, 0, 1, 1], [], []>} : vector<8x128xf32>, vector<128x128xf32>, vector<8x128xf32> -> vector<8x128xf32>
    %c2_34 = arith.constant 2 : index
    %c0_35 = arith.constant 0 : index
    %c0_36 = arith.constant 0 : index
    %41 = vector.load %arg9[%c2_34, %c0_35, %c0_36] : memref<4x1x128xf32, #tpu.memory_space<vmem>>, vector<1x1x128xf32>
    %42 = vector.shape_cast %41 : vector<1x1x128xf32> to vector<1x128xf32>
    %43 = vector.broadcast %42 : vector<1x128xf32> to vector<8x128xf32>
    %44 = arith.addf %40, %43 : vector<8x128xf32>
    %cst_37 = arith.constant 0.000000e+00 : f32
    %45 = vector.broadcast %cst_37 : f32 to vector<8x128xf32>
    %46 = arith.maximumf %44, %45 : vector<8x128xf32>
    %c3 = arith.constant 3 : index
    %c0_38 = arith.constant 0 : index
    %c0_39 = arith.constant 0 : index
    %47 = vector.load %arg8[%c3, %c0_38, %c0_39] : memref<4x128x128xf32, #tpu.memory_space<vmem>>, vector<1x128x128xf32>
    %48 = vector.shape_cast %47 : vector<1x128x128xf32> to vector<128x128xf32>
    %cst_40 = arith.constant dense<0.000000e+00> : vector<8x128xf32>
    %49 = tpu.matmul %46, %48, %cst_40 {dimension_numbers = #tpu.dot_dimension_numbers<[1], [0], [0], [1], [0, 0, 1, 1], [], []>} : vector<8x128xf32>, vector<128x128xf32>, vector<8x128xf32> -> vector<8x128xf32>
    %c3_41 = arith.constant 3 : index
    %c0_42 = arith.constant 0 : index
    %c0_43 = arith.constant 0 : index
    %50 = vector.load %arg9[%c3_41, %c0_42, %c0_43] : memref<4x1x128xf32, #tpu.memory_space<vmem>>, vector<1x1x128xf32>
    %51 = vector.shape_cast %50 : vector<1x1x128xf32> to vector<1x128xf32>
    %52 = vector.broadcast %51 : vector<1x128xf32> to vector<8x128xf32>
    %53 = arith.addf %49, %52 : vector<8x128xf32>
    %c0_44 = arith.constant 0 : index
    %c0_45 = arith.constant 0 : index
    %54 = vector.load %arg10[%c0_44, %c0_45] : memref<8x128xf32, #tpu.memory_space<vmem>>, vector<8x128xf32>
    tpu.vector_store %arg10[%c0_44, %c0_45], %53 {strides = array<i32>} : memref<8x128xf32, #tpu.memory_space<vmem>>, vector<8x128xf32>,
    return
  }
  func.func @transform_0(%arg0: i32) -> (i32, i32) {
    %c0_i32 = arith.constant 0 : i32
    %c0_i32_0 = arith.constant 0 : i32
    return %arg0, %c0_i32 : i32, i32
  }
  func.func @transform_1(%arg0: i32) -> (i32, i32) {
    %c0_i32 = arith.constant 0 : i32
    %c0_i32_0 = arith.constant 0 : i32
    return %arg0, %c0_i32 : i32, i32
  }
  func.func @transform_2(%arg0: i32) -> (i32, i32) {
    %c0_i32 = arith.constant 0 : i32
    %c0_i32_0 = arith.constant 0 : i32
    %c0_i32_1 = arith.constant 0 : i32
    return %c0_i32, %c0_i32_0 : i32, i32
  }
  func.func @transform_3(%arg0: i32) -> (i32, i32) {
    %c0_i32 = arith.constant 0 : i32
    %c0_i32_0 = arith.constant 0 : i32
    %c0_i32_1 = arith.constant 0 : i32
    return %c0_i32, %c0_i32_0 : i32, i32
  }
  func.func @transform_4(%arg0: i32) -> (i32, i32) {
    %c0_i32 = arith.constant 0 : i32
    %c0_i32_0 = arith.constant 0 : i32
    %c0_i32_1 = arith.constant 0 : i32
    return %c0_i32, %c0_i32_0 : i32, i32
  }
  func.func @transform_5(%arg0: i32) -> (i32, i32) {
    %c0_i32 = arith.constant 0 : i32
    %c0_i32_0 = arith.constant 0 : i32
    %c0_i32_1 = arith.constant 0 : i32
    return %c0_i32, %c0_i32_0 : i32, i32
  }
  func.func @transform_6(%arg0: i32) -> (i32, i32) {
    %c0_i32 = arith.constant 0 : i32
    %c0_i32_0 = arith.constant 0 : i32
    %c0_i32_1 = arith.constant 0 : i32
    return %c0_i32, %c0_i32_0 : i32, i32
  }
  func.func @transform_7(%arg0: i32) -> (i32, i32, i32) {
    %c0_i32 = arith.constant 0 : i32
    %c0_i32_0 = arith.constant 0 : i32
    %c0_i32_1 = arith.constant 0 : i32
    %c0_i32_2 = arith.constant 0 : i32
    return %c0_i32, %c0_i32_0, %c0_i32_1 : i32, i32, i32
  }
  func.func @transform_8(%arg0: i32) -> (i32, i32, i32) {
    %c0_i32 = arith.constant 0 : i32
    %c0_i32_0 = arith.constant 0 : i32
    %c0_i32_1 = arith.constant 0 : i32
    %c0_i32_2 = arith.constant 0 : i32
    return %c0_i32, %c0_i32_0, %c0_i32_1 : i32, i32, i32
  }
  func.func @transform_9(%arg0: i32) -> (i32, i32) {
    %c0_i32 = arith.constant 0 : i32
    %c0_i32_0 = arith.constant 0 : i32
    return %arg0, %c0_i32 : i32, i32
  }
}

</mosaic_0001>

<llo_original>
// kernel: deepq_forward.1
$region0: #{deepq_forward.1}
  #allocation0 [shape = 'u32[]', space=smem, size = 0x4, offset = 0x4, fixed_abs, tag = 'smem constant byte address 0x4 - core index']
  #allocation1 [shape = 'u32[144,128]{1,0:T(1,128)}', space=vmem, size = 0x12000, scoped, tag = 'internal scratch']
  %s0 = inlined_call_operand.vmem [shape: s32[8,25], index: 0, kind: input, shape index: {}]
  %s1 = inlined_call_operand.vmem [shape: f32[8,4], index: 1, kind: input, shape index: {}]
  %s2 = inlined_call_operand.hbm [shape: f32[25,256], index: 2, kind: input, shape index: {}]
  %s3 = inlined_call_operand.vmem [shape: f32[1,256], index: 3, kind: input, shape index: {}]
  %s4 = inlined_call_operand.hbm [shape: f32[256,128], index: 4, kind: input, shape index: {}]
  %s5 = inlined_call_operand.vmem [shape: f32[4,128], index: 5, kind: input, shape index: {}]
  %s6 = inlined_call_operand.vmem [shape: f32[1,128], index: 6, kind: input, shape index: {}]
  %s7 = inlined_call_operand.hbm [shape: f32[4,128,128], index: 7, kind: input, shape index: {}]
  %s8 = inlined_call_operand.vmem [shape: f32[4,1,128], index: 8, kind: input, shape index: {}]
  %s9 = inlined_call_operand.hbm [shape: f32[8,128], index: 9, kind: output, shape index: {}]
  %s10 = sld [smem:[#allocation0]]
  $region58: #{deepq_forward.1} parent=0
    _
  %s12 = ssub.s32 1, %s10
  %s13 = scalar_select 0, %s12, %s10
  $region1: #{deepq_forward.1} parent=0
    #allocation2 [shape = 'u8[32768]{0}', space=vmem, size = 0x8000, scoped, tag = 'input window, operand 2, single buffered']
    #allocation3 [shape = 's32[1]{0}', space=sflag, size = 0x4, scoped, tag = 'scoped memory for deepq_forward.1']
    #allocation4 [shape = 's32[1]{0}', space=sflag, size = 0x4, scoped, tag = 'scoped memory for deepq_forward.1']
    #allocation5 [shape = 'u8[131072]{0}', space=vmem, size = 0x20000, scoped, tag = 'input window, operand 4, single buffered']
    #allocation6 [shape = 's32[1]{0}', space=sflag, size = 0x4, scoped, tag = 'scoped memory for deepq_forward.1']
    #allocation7 [shape = 'u8[262144]{0}', space=vmem, size = 0x40000, scoped, tag = 'input window, operand 7, single buffered']
    #allocation8 [shape = 'u8[4096]{0}', space=vmem, size = 0x1000, scoped, tag = 'output window, operand 0, single buffered']
    %14 = vsyncpa [#allocation3], 0
    %15 = vsyncpa [#allocation6], 0
    %16 = vsyncpa [#allocation4], 0
    // Predicated region
    $region2: #{deepq_forward.1} parent=1 // pred_check
      _
    $region3: #{deepq_forward.1} parent=1 // pred_check_branch
      %18 = sbr.rel (0) target = $region5
    $region4: #{deepq_forward.1} parent=1 // pred_region
      _
    $region5: #{deepq_forward.1} parent=1 // pred_fallthru
      _
    // Predicated region
    $region6: #{deepq_forward.1} parent=1 // pred_check
      _
    $region7: #{deepq_forward.1} parent=1 // pred_check_branch
      %20 = sbr.rel (0) target = $region9
    $region8: #{deepq_forward.1} parent=1 // pred_region
      _
    $region9: #{deepq_forward.1} parent=1 // pred_fallthru
      _
    // Predicated region
    $region10: #{deepq_forward.1} parent=1 // pred_check
      _
    $region11: #{deepq_forward.1} parent=1 // pred_check_branch
      %22 = sbr.rel (0) target = $region13
    $region12: #{deepq_forward.1} parent=1 // pred_region
      %s24 = ssub.s32 1024, 1024
      %25 = vsyncadd [#allocation3], %s24
      %s26 = sshll.u32 [#allocation2], 4
      %s27 = int_to_ptr.vmem [resolvable:$true] %s26
      %32 = dma.hbm_to_vmem [thread:$0]  %s2, 1024, %s27, [#allocation3], 256, 256, 16
    $region13: #{deepq_forward.1} parent=1 // pred_fallthru
      _
    // Predicated region
    $region14: #{deepq_forward.1} parent=1 // pred_check
      _
    $region15: #{deepq_forward.1} parent=1 // pred_check_branch
      %34 = sbr.rel (0) target = $region17
    $region16: #{deepq_forward.1} parent=1 // pred_region
      _
    $region17: #{deepq_forward.1} parent=1 // pred_fallthru
      _
    // Predicated region
    $region18: #{deepq_forward.1} parent=1 // pred_check
      _
    $region19: #{deepq_forward.1} parent=1 // pred_check_branch
      %36 = sbr.rel (0) target = $region21
    $region20: #{deepq_forward.1} parent=1 // pred_region
      %s38 = ssub.s32 4096, 4096
      %39 = vsyncadd [#allocation6], %s38
      %s40 = sshll.u32 [#allocation5], 4
      %s41 = int_to_ptr.vmem [resolvable:$true] %s40
      %46 = dma.hbm_to_vmem [thread:$0]  %s4, 4096, %s41, [#allocation6], 128, 128, 8
    $region21: #{deepq_forward.1} parent=1 // pred_fallthru
      _
    // Predicated region
    $region22: #{deepq_forward.1} parent=1 // pred_check
      _
    $region23: #{deepq_forward.1} parent=1 // pred_check_branch
      %48 = sbr.rel (0) target = $region25
    $region24: #{deepq_forward.1} parent=1 // pred_region
      _
    $region25: #{deepq_forward.1} parent=1 // pred_fallthru
      _
    // Predicated region
    $region26: #{deepq_forward.1} parent=1 // pred_check
      _
    $region27: #{deepq_forward.1} parent=1 // pred_check_branch
      %50 = sbr.rel (0) target = $region29
    $region28: #{deepq_forward.1} parent=1 // pred_region
      _
    $region29: #{deepq_forward.1} parent=1 // pred_fallthru
      _
    // Predicated region
    $region30: #{deepq_forward.1} parent=1 // pred_check
      _
    $region31: #{deepq_forward.1} parent=1 // pred_check_branch
      %52 = sbr.rel (0) target = $region33
    $region32: #{deepq_forward.1} parent=1 // pred_region
      %s54 = ssub.s32 8192, 8192
      %55 = vsyncadd [#allocation6], %s54
      %s56 = sshll.u32 [#allocation7], 4
      %s57 = int_to_ptr.vmem [resolvable:$true] %s56
      %62 = dma.hbm_to_vmem [thread:$0]  %s7, 8192, %s57, [#allocation6], 128, 128, 8
    $region33: #{deepq_forward.1} parent=1 // pred_fallthru
      _
    // Predicated region
    $region34: #{deepq_forward.1} parent=1 // pred_check
      _
    $region35: #{deepq_forward.1} parent=1 // pred_check_branch
      %64 = sbr.rel (0) target = $region37
    $region36: #{deepq_forward.1} parent=1 // pred_region
      _
    $region37: #{deepq_forward.1} parent=1 // pred_fallthru
      _
    // Predicated region
    $region38: #{deepq_forward.1} parent=1 // pred_check
      _
    $region39: #{deepq_forward.1} parent=1 // pred_check_branch
      %66 = sbr.rel (0) target = $region41
    $region40: #{deepq_forward.1} parent=1 // pred_region
      %67 = dma.done [#allocation3], 1024
    $region41: #{deepq_forward.1} parent=1 // pred_fallthru
      _
    // Predicated region
    $region42: #{deepq_forward.1} parent=1 // pred_check
      _
    $region43: #{deepq_forward.1} parent=1 // pred_check_branch
      %69 = sbr.rel (0) target = $region45
    $region44: #{deepq_forward.1} parent=1 // pred_region
      %70 = dma.done [#allocation6], 4096
    $region45: #{deepq_forward.1} parent=1 // pred_fallthru
      _
    // Predicated region
    $region46: #{deepq_forward.1} parent=1 // pred_check
      _
    $region47: #{deepq_forward.1} parent=1 // pred_check_branch
      %72 = sbr.rel (0) target = $region49
    $region48: #{deepq_forward.1} parent=1 // pred_region
      %73 = dma.done [#allocation6], 8192
    $region49: #{deepq_forward.1} parent=1 // pred_fallthru
      _
    %v74 = vld [vmem:[%s0] sm:$0xff]
    %v75 = vcvt.s32.f32 %v74
    %v76 = vld [vmem:[#allocation2] sm:$0xff]
    %v77 = vld [vmem:[#allocation2 + $0x8] sm:$0xff]
    %v78 = vld [vmem:[#allocation2 + $0x10] sm:$0xff]
    %v79 = vld [vmem:[#allocation2 + $0x18] sm:$0xff]
    %v80 = vld [vmem:[#allocation2 + $0x20] sm:$0xff]
    %v81 = vld [vmem:[#allocation2 + $0x28] sm:$0xff]
    %v82 = vld [vmem:[#allocation2 + $0x30] sm:$0x1]
    %v83 = vld [vmem:[#allocation2 + $0x38] sm:$0x1]
    %vm84 = vcmask 203776
    %v86 = vsel %vm84, %v75, 0
    %vm88 = vcmask 1040384
    %v90 = vsel %vm88, %v82, 0
    %v93 = vsel %vm88, %v83, 0
    %95 = vmatprep.subr.mxu0 %v77
    %96 = vmatpush1.msra.mxu0 %v76
    %97 = vmatprep.subr.mxu0 %v79
    %98 = vmatpush1.msra.mxu0 %v78
    %99 = vmatprep.subr.mxu0 %v81
    %100 = vmatpush1.msra.mxu0 %v80
    %101 = vmatprep.subr.mxu0 %v93
    %102 = vmatpush1.msra.mxu0 %v90
    %103 = vmatprep.subr.mxu0 0.0
    %104 = vmatpush1.msra.mxu0 0.0
    %105 = vmatprep.subr.mxu0 0.0
    %106 = vmatpush1.msra.mxu0 0.0
    %107 = vmatprep.subr.mxu0 0.0
    %108 = vmatpush1.msra.mxu0 0.0
    %109 = vmatprep.subr.mxu0 0.0
    %110 = vmatpush1.msra.mxu0 0.0
    %111 = vmatprep.subr.mxu0 0.0
    %112 = vmatpush1.msra.mxu0 0.0
    %113 = vmatprep.subr.mxu0 0.0
    %114 = vmatpush1.msra.mxu0 0.0
    %115 = vmatprep.subr.mxu0 0.0
    %116 = vmatpush1.msra.mxu0 0.0
    %117 = vmatprep.subr.mxu0 0.0
    %118 = vmatpush1.msra.mxu0 0.0
    %119 = vmatprep.subr.mxu0 0.0
    %120 = vmatpush1.msra.mxu0 0.0
    %121 = vmatprep.subr.mxu0 0.0
    %122 = vmatpush1.msra.mxu0 0.0
    %123 = vmatprep.subr.mxu0 0.0
    %124 = vmatpush1.msra.mxu0 0.0
    %125 = vmatprep.subr.mxu0 0.0
    %126 = vmatpush1.msra.mxu0 0.0
    %127 = vmatprep.subr.mxu0 0.0
    %128 = vmatpush1.msra.mxu0 0.0
    %129 = vmatprep.subr.mxu0 0.0
    %130 = vmatpush1.msra.mxu0 0.0
    %131 = vmatprep.subr.mxu0 0.0
    %132 = vmatpush1.msra.mxu0 0.0
    %133 = vmatprep.subr.mxu0 0.0
    %134 = vmatpush1.msra.mxu0 0.0
    %135 = vmatprep.subr.mxu0 0.0
    %136 = vmatpush1.msra.mxu0 0.0
    %137 = vmatprep.subr.mxu0 0.0
    %138 = vmatpush1.msra.mxu0 0.0
    %139 = vmatprep.subr.mxu0 0.0
    %140 = vmatpush1.msra.mxu0 0.0
    %141 = vmatprep.subr.mxu0 0.0
    %142 = vmatpush1.msra.mxu0 0.0
    %143 = vmatprep.subr.mxu0 0.0
    %144 = vmatpush1.msra.mxu0 0.0
    %145 = vmatprep.subr.mxu0 0.0
    %146 = vmatpush1.msra.mxu0 0.0
    %147 = vmatprep.subr.mxu0 0.0
    %148 = vmatpush1.msra.mxu0 0.0
    %149 = vmatprep.subr.mxu0 0.0
    %150 = vmatpush1.msra.mxu0 0.0
    %151 = vmatprep.subr.mxu0 0.0
    %152 = vmatpush1.msra.mxu0 0.0
    %153 = vmatprep.subr.mxu0 0.0
    %154 = vmatpush1.msra.mxu0 0.0
    %155 = vmatprep.subr.mxu0 0.0
    %156 = vmatpush1.msra.mxu0 0.0
    %157 = vmatprep.subr.mxu0 0.0
    %158 = vmatpush1.msra.mxu0 0.0
    %159 = vmatprep.mubr.f32.mxu0 0.0
    %160 = vmatmul.mubr.f32.gmra.mrb[0].mxu0 %v86
    %v161 = vpop.f32.mrb[0].mxu0
    %v162 = vadd.f32 0.0, %v161
    %v163 = vpop.f32.mrb[0].mxu0
    %v164 = vadd.f32 0.0, %v163
    %165 = vdwg.mxu0
    %v166 = vld [vmem:[%s3] sm:$0x3]
    %v168 = vlaneseq
    %v169 = vshrl.u32 %v168, 7
    %v170 = vsub.s32 0, %v169
    %v171 = vrot.slane %v166, %v170
    %v172 = vlaneseq
    %v173 = vshrl.u32 %v172, 7
    %v174 = vsub.s32 1, %v173
    %v175 = vrot.slane %v166, %v174
    %vm178 = vcmp.eq.f32.partialorder %v162, %v171
    %vm179 = vcmp.eq.f32.partialorder %v164, %v175
    %v180 = vsel %vm178, 1, 0
    %v181 = vsel %vm179, 1, 0
    %v182 = vcvt.s32.f32 %v180
    %v183 = vcvt.s32.f32 %v181
    %v184 = vld [vmem:[#allocation5] sm:$0xff]
    %v185 = vld [vmem:[#allocation5 + $0x8] sm:$0xff]
    %v186 = vld [vmem:[#allocation5 + $0x10] sm:$0xff]
    %v187 = vld [vmem:[#allocation5 + $0x18] sm:$0xff]
    %v188 = vld [vmem:[#allocation5 + $0x20] sm:$0xff]
    %v189 = vld [vmem:[#allocation5 + $0x28] sm:$0xff]
    %v190 = vld [vmem:[#allocation5 + $0x30] sm:$0xff]
    %v191 = vld [vmem:[#allocation5 + $0x38] sm:$0xff]
    %v192 = vld [vmem:[#allocation5 + $0x40] sm:$0xff]
    %v193 = vld [vmem:[#allocation5 + $0x48] sm:$0xff]
    %v194 = vld [vmem:[#allocation5 + $0x50] sm:$0xff]
    %v195 = vld [vmem:[#allocation5 + $0x58] sm:$0xff]
    %v196 = vld [vmem:[#allocation5 + $0x60] sm:$0xff]
    %v197 = vld [vmem:[#allocation5 + $0x68] sm:$0xff]
    %v198 = vld [vmem:[#allocation5 + $0x70] sm:$0xff]
    %v199 = vld [vmem:[#allocation5 + $0x78] sm:$0xff]
    %v200 = vld [vmem:[#allocation5 + $0x80] sm:$0xff]
    %v201 = vld [vmem:[#allocation5 + $0x88] sm:$0xff]
    %v202 = vld [vmem:[#allocation5 + $0x90] sm:$0xff]
    %v203 = vld [vmem:[#allocation5 + $0x98] sm:$0xff]
    %v204 = vld [vmem:[#allocation5 + $0xa0] sm:$0xff]
    %v205 = vld [vmem:[#allocation5 + $0xa8] sm:$0xff]
    %v206 = vld [vmem:[#allocation5 + $0xb0] sm:$0xff]
    %v207 = vld [vmem:[#allocation5 + $0xb8] sm:$0xff]
    %v208 = vld [vmem:[#allocation5 + $0xc0] sm:$0xff]
    %v209 = vld [vmem:[#allocation5 + $0xc8] sm:$0xff]
    %v210 = vld [vmem:[#allocation5 + $0xd0] sm:$0xff]
    %v211 = vld [vmem:[#allocation5 + $0xd8] sm:$0xff]
    %v212 = vld [vmem:[#allocation5 + $0xe0] sm:$0xff]
    %v213 = vld [vmem:[#allocation5 + $0xe8] sm:$0xff]
    %v214 = vld [vmem:[#allocation5 + $0xf0] sm:$0xff]
    %v215 = vld [vmem:[#allocation5 + $0xf8] sm:$0xff]
    %v216 = vld [vmem:[%s1] sm:$0xff]
    %v217 = vld [vmem:[%s5] sm:$0xf]
    %vm218 = vcmask 31744
    %v220 = vsel %vm218, %v216, 0
    %vm222 = vcmask 1043456
    %v224 = vsel %vm222, %v217, 0
    %226 = vmatprep.subr.mxu0 0.0
    %227 = vmatpush1.msra.mxu0 %v224
    %228 = vmatprep.subr.mxu0 0.0
    %229 = vmatpush1.msra.mxu0 0.0
    %230 = vmatprep.subr.mxu0 0.0
    %231 = vmatpush1.msra.mxu0 0.0
    %232 = vmatprep.subr.mxu0 0.0
    %233 = vmatpush1.msra.mxu0 0.0
    %234 = vmatprep.subr.mxu0 0.0
    %235 = vmatpush1.msra.mxu0 0.0
    %236 = vmatprep.subr.mxu0 0.0
    %237 = vmatpush1.msra.mxu0 0.0
    %238 = vmatprep.subr.mxu0 0.0
    %239 = vmatpush1.msra.mxu0 0.0
    %240 = vmatprep.subr.mxu0 0.0
    %241 = vmatpush1.msra.mxu0 0.0
    %242 = vmatprep.subr.mxu0 0.0
    %243 = vmatpush1.msra.mxu0 0.0
    %244 = vmatprep.subr.mxu0 0.0
    %245 = vmatpush1.msra.mxu0 0.0
    %246 = vmatprep.subr.mxu0 0.0
    %247 = vmatpush1.msra.mxu0 0.0
    %248 = vmatprep.subr.mxu0 0.0
    %249 = vmatpush1.msra.mxu0 0.0
    %250 = vmatprep.subr.mxu0 0.0
    %251 = vmatpush1.msra.mxu0 0.0
    %252 = vmatprep.subr.mxu0 0.0
    %253 = vmatpush1.msra.mxu0 0.0
    %254 = vmatprep.subr.mxu0 0.0
    %255 = vmatpush1.msra.mxu0 0.0
    %256 = vmatprep.subr.mxu0 0.0
    %257 = vmatpush1.msra.mxu0 0.0
    %258 = vmatprep.subr.mxu0 0.0
    %259 = vmatpush1.msra.mxu0 0.0
    %260 = vmatprep.subr.mxu0 0.0
    %261 = vmatpush1.msra.mxu0 0.0
    %262 = vmatprep.subr.mxu0 0.0
    %263 = vmatpush1.msra.mxu0 0.0
    %264 = vmatprep.subr.mxu0 0.0
    %265 = vmatpush1.msra.mxu0 0.0
    %266 = vmatprep.subr.mxu0 0.0
    %267 = vmatpush1.msra.mxu0 0.0
    %268 = vmatprep.subr.mxu0 0.0
    %269 = vmatpush1.msra.mxu0 0.0
    %270 = vmatprep.subr.mxu0 0.0
    %271 = vmatpush1.msra.mxu0 0.0
    %272 = vmatprep.subr.mxu0 0.0
    %273 = vmatpush1.msra.mxu0 0.0
    %274 = vmatprep.subr.mxu0 0.0
    %275 = vmatpush1.msra.mxu0 0.0
    %276 = vmatprep.subr.mxu0 0.0
    %277 = vmatpush1.msra.mxu0 0.0
    %278 = vmatprep.subr.mxu0 0.0
    %279 = vmatpush1.msra.mxu0 0.0
    %280 = vmatprep.subr.mxu0 0.0
    %281 = vmatpush1.msra.mxu0 0.0
    %282 = vmatprep.subr.mxu0 0.0
    %283 = vmatpush1.msra.mxu0 0.0
    %284 = vmatprep.subr.mxu0 0.0
    %285 = vmatpush1.msra.mxu0 0.0
    %286 = vmatprep.subr.mxu0 0.0
    %287 = vmatpush1.msra.mxu0 0.0
    %288 = vmatprep.subr.mxu0 0.0
    %289 = vmatpush1.msra.mxu0 0.0
    %290 = vmatprep.mubr.f32.mxu0 0.0
    %291 = vmatmul.mubr.f32.gmra.mrb[0].mxu0 %v220
    %v292 = vpop.f32.mrb[0].mxu0
    %v293 = vadd.f32 0.0, %v292
    %v294 = vpop.f32.mrb[0].mxu0
    %295 = vdwg.mxu0
    %296 = vmatprep.subr.mxu0 0.0
    %297 = vmatpush1.msra.mxu0 %v184
    %298 = vmatprep.subr.mxu0 0.0
    %299 = vmatpush1.msra.mxu0 %v185
    %300 = vmatprep.subr.mxu0 0.0
    %301 = vmatpush1.msra.mxu0 %v186
    %302 = vmatprep.subr.mxu0 0.0
    %303 = vmatpush1.msra.mxu0 %v187
    %304 = vmatprep.subr.mxu0 0.0
    %305 = vmatpush1.msra.mxu0 %v188
    %306 = vmatprep.subr.mxu0 0.0
    %307 = vmatpush1.msra.mxu0 %v189
    %308 = vmatprep.subr.mxu0 0.0
    %309 = vmatpush1.msra.mxu0 %v190
    %310 = vmatprep.subr.mxu0 0.0
    %311 = vmatpush1.msra.mxu0 %v191
    %312 = vmatprep.subr.mxu0 0.0
    %313 = vmatpush1.msra.mxu0 %v192
    %314 = vmatprep.subr.mxu0 0.0
    %315 = vmatpush1.msra.mxu0 %v193
    %316 = vmatprep.subr.mxu0 0.0
    %317 = vmatpush1.msra.mxu0 %v194
    %318 = vmatprep.subr.mxu0 0.0
    %319 = vmatpush1.msra.mxu0 %v195
    %320 = vmatprep.subr.mxu0 0.0
    %321 = vmatpush1.msra.mxu0 %v196
    %322 = vmatprep.subr.mxu0 0.0
    %323 = vmatpush1.msra.mxu0 %v197
    %324 = vmatprep.subr.mxu0 0.0
    %325 = vmatpush1.msra.mxu0 %v198
    %326 = vmatprep.subr.mxu0 0.0
    %327 = vmatpush1.msra.mxu0 %v199
    %328 = vmatprep.subr.mxu0 0.0
    %329 = vmatpush1.msra.mxu0 %v200
    %330 = vmatprep.subr.mxu0 0.0
    %331 = vmatpush1.msra.mxu0 %v201
    %332 = vmatprep.subr.mxu0 0.0
    %333 = vmatpush1.msra.mxu0 %v202
    %334 = vmatprep.subr.mxu0 0.0
    %335 = vmatpush1.msra.mxu0 %v203
    %336 = vmatprep.subr.mxu0 0.0
    %337 = vmatpush1.msra.mxu0 %v204
    %338 = vmatprep.subr.mxu0 0.0
    %339 = vmatpush1.msra.mxu0 %v205
    %340 = vmatprep.subr.mxu0 0.0
    %341 = vmatpush1.msra.mxu0 %v206
    %342 = vmatprep.subr.mxu0 0.0
    %343 = vmatpush1.msra.mxu0 %v207
    %344 = vmatprep.subr.mxu0 0.0
    %345 = vmatpush1.msra.mxu0 %v208
    %346 = vmatprep.subr.mxu0 0.0
    %347 = vmatpush1.msra.mxu0 %v209
    %348 = vmatprep.subr.mxu0 0.0
    %349 = vmatpush1.msra.mxu0 %v210
    %350 = vmatprep.subr.mxu0 0.0
    %351 = vmatpush1.msra.mxu0 %v211
    %352 = vmatprep.subr.mxu0 0.0
    %353 = vmatpush1.msra.mxu0 %v212
    %354 = vmatprep.subr.mxu0 0.0
    %355 = vmatpush1.msra.mxu0 %v213
    %356 = vmatprep.subr.mxu0 0.0
    %357 = vmatpush1.msra.mxu0 %v214
    %358 = vmatprep.subr.mxu0 0.0
    %359 = vmatpush1.msra.mxu0 %v215
    %360 = vmatprep.mubr.f32.mxu0 %v183
    %361 = vmatmul.mubr.f32.gmra.mrb[0].mxu0 %v182
    %v362 = vpop.f32.mrb[0].mxu0
    %v363 = vadd.f32 %v293, %v362
    %v364 = vpop.f32.mrb[0].mxu0
    %365 = vdwg.mxu0
    %v366 = vld [vmem:[%s6] sm:$0x1]
    %v368 = vlaneseq
    %v369 = vshrl.u32 %v368, 7
    %v370 = vsub.s32 0, %v369
    %v371 = vrot.slane %v366, %v370
    %v373 = vadd.f32 %v363, %v371
    %v374 = vmax.f32 %v373, 0.0
    %v375 = vld [vmem:[#allocation7] sm:$0xff]
    %v376 = vld [vmem:[#allocation7 + $0x8] sm:$0xff]
    %v377 = vld [vmem:[#allocation7 + $0x10] sm:$0xff]
    %v378 = vld [vmem:[#allocation7 + $0x18] sm:$0xff]
    %v379 = vld [vmem:[#allocation7 + $0x20] sm:$0xff]
    %v380 = vld [vmem:[#allocation7 + $0x28] sm:$0xff]
    %v381 = vld [vmem:[#allocation7 + $0x30] sm:$0xff]
    %v382 = vld [vmem:[#allocation7 + $0x38] sm:$0xff]
    %v383 = vld [vmem:[#allocation7 + $0x40] sm:$0xff]
    %v384 = vld [vmem:[#allocation7 + $0x48] sm:$0xff]
    %v385 = vld [vmem:[#allocation7 + $0x50] sm:$0xff]
    %v386 = vld [vmem:[#allocation7 + $0x58] sm:$0xff]
    %v387 = vld [vmem:[#allocation7 + $0x60] sm:$0xff]
    %v388 = vld [vmem:[#allocation7 + $0x68] sm:$0xff]
    %v389 = vld [vmem:[#allocation7 + $0x70] sm:$0xff]
    %v390 = vld [vmem:[#allocation7 + $0x78] sm:$0xff]
    %v391 = vld [vmem:[%s8] sm:$0x1]
    %v393 = vlaneseq
    %v394 = vshrl.u32 %v393, 7
    %v395 = vsub.s32 0, %v394
    %v396 = vrot.slane %v391, %v395
    %398 = vmatprep.subr.mxu0 0.0
    %399 = vmatpush1.msra.mxu0 %v375
    %400 = vmatprep.subr.mxu0 0.0
    %401 = vmatpush1.msra.mxu0 %v376
    %402 = vmatprep.subr.mxu0 0.0
    %403 = vmatpush1.msra.mxu0 %v377
    %404 = vmatprep.subr.mxu0 0.0
    %405 = vmatpush1.msra.mxu0 %v378
    %406 = vmatprep.subr.mxu0 0.0
    %407 = vmatpush1.msra.mxu0 %v379
    %408 = vmatprep.subr.mxu0 0.0
    %409 = vmatpush1.msra.mxu0 %v380
    %410 = vmatprep.subr.mxu0 0.0
    %411 = vmatpush1.msra.mxu0 %v381
    %412 = vmatprep.subr.mxu0 0.0
    %413 = vmatpush1.msra.mxu0 %v382
    %414 = vmatprep.subr.mxu0 0.0
    %415 = vmatpush1.msra.mxu0 %v383
    %416 = vmatprep.subr.mxu0 0.0
    %417 = vmatpush1.msra.mxu0 %v384
    %418 = vmatprep.subr.mxu0 0.0
    %419 = vmatpush1.msra.mxu0 %v385
    %420 = vmatprep.subr.mxu0 0.0
    %421 = vmatpush1.msra.mxu0 %v386
    %422 = vmatprep.subr.mxu0 0.0
    %423 = vmatpush1.msra.mxu0 %v387
    %424 = vmatprep.subr.mxu0 0.0
    %425 = vmatpush1.msra.mxu0 %v388
    %426 = vmatprep.subr.mxu0 0.0
    %427 = vmatpush1.msra.mxu0 %v389
    %428 = vmatprep.subr.mxu0 0.0
    %429 = vmatpush1.msra.mxu0 %v390
    %430 = vmatprep.subr.mxu0 0.0
    %431 = vmatpush1.msra.mxu0 0.0
    %432 = vmatprep.subr.mxu0 0.0
    %433 = vmatpush1.msra.mxu0 0.0
    %434 = vmatprep.subr.mxu0 0.0
    %435 = vmatpush1.msra.mxu0 0.0
    %436 = vmatprep.subr.mxu0 0.0
    %437 = vmatpush1.msra.mxu0 0.0
    %438 = vmatprep.subr.mxu0 0.0
    %439 = vmatpush1.msra.mxu0 0.0
    %440 = vmatprep.subr.mxu0 0.0
    %441 = vmatpush1.msra.mxu0 0.0
    %442 = vmatprep.subr.mxu0 0.0
    %443 = vmatpush1.msra.mxu0 0.0
    %444 = vmatprep.subr.mxu0 0.0
    %445 = vmatpush1.msra.mxu0 0.0
    %446 = vmatprep.subr.mxu0 0.0
    %447 = vmatpush1.msra.mxu0 0.0
    %448 = vmatprep.subr.mxu0 0.0
    %449 = vmatpush1.msra.mxu0 0.0
    %450 = vmatprep.subr.mxu0 0.0
    %451 = vmatpush1.msra.mxu0 0.0
    %452 = vmatprep.subr.mxu0 0.0
    %453 = vmatpush1.msra.mxu0 0.0
    %454 = vmatprep.subr.mxu0 0.0
    %455 = vmatpush1.msra.mxu0 0.0
    %456 = vmatprep.subr.mxu0 0.0
    %457 = vmatpush1.msra.mxu0 0.0
    %458 = vmatprep.subr.mxu0 0.0
    %459 = vmatpush1.msra.mxu0 0.0
    %460 = vmatprep.subr.mxu0 0.0
    %461 = vmatpush1.msra.mxu0 0.0
    %462 = vmatprep.mubr.f32.mxu0 0.0
    %463 = vmatmul.mubr.f32.gmra.mrb[0].mxu0 %v374
    %v464 = vpop.f32.mrb[0].mxu0
    %v465 = vadd.f32 %v396, %v464
    %v466 = vpop.f32.mrb[0].mxu0
    %467 = vdwg.mxu0
    %v468 = vmax.f32 %v465, 0.0
    %s469 = scalar_lea.vmem [#allocation7], 128
    %v470 = vld [vmem:[%s469] sm:$0xff]
    %v471 = vld [vmem:[%s469 + $0x8] sm:$0xff]
    %v472 = vld [vmem:[%s469 + $0x10] sm:$0xff]
    %v473 = vld [vmem:[%s469 + $0x18] sm:$0xff]
    %v474 = vld [vmem:[%s469 + $0x20] sm:$0xff]
    %v475 = vld [vmem:[%s469 + $0x28] sm:$0xff]
    %v476 = vld [vmem:[%s469 + $0x30] sm:$0xff]
    %v477 = vld [vmem:[%s469 + $0x38] sm:$0xff]
    %v478 = vld [vmem:[%s469 + $0x40] sm:$0xff]
    %v479 = vld [vmem:[%s469 + $0x48] sm:$0xff]
    %v480 = vld [vmem:[%s469 + $0x50] sm:$0xff]
    %v481 = vld [vmem:[%s469 + $0x58] sm:$0xff]
    %v482 = vld [vmem:[%s469 + $0x60] sm:$0xff]
    %v483 = vld [vmem:[%s469 + $0x68] sm:$0xff]
    %v484 = vld [vmem:[%s469 + $0x70] sm:$0xff]
    %v485 = vld [vmem:[%s469 + $0x78] sm:$0xff]
    %s486 = scalar_lea.vmem %s8, 1
    %v487 = vld [vmem:[%s486] sm:$0x1]
    %v489 = vlaneseq
    %v490 = vshrl.u32 %v489, 7
    %v491 = vsub.s32 0, %v490
    %v492 = vrot.slane %v487, %v491
    %494 = vmatprep.subr.mxu0 0.0
    %495 = vmatpush1.msra.mxu0 %v470
    %496 = vmatprep.subr.mxu0 0.0
    %497 = vmatpush1.msra.mxu0 %v471
    %498 = vmatprep.subr.mxu0 0.0
    %499 = vmatpush1.msra.mxu0 %v472
    %500 = vmatprep.subr.mxu0 0.0
    %501 = vmatpush1.msra.mxu0 %v473
    %502 = vmatprep.subr.mxu0 0.0
    %503 = vmatpush1.msra.mxu0 %v474
    %504 = vmatprep.subr.mxu0 0.0
    %505 = vmatpush1.msra.mxu0 %v475
    %506 = vmatprep.subr.mxu0 0.0
    %507 = vmatpush1.msra.mxu0 %v476
    %508 = vmatprep.subr.mxu0 0.0
    %509 = vmatpush1.msra.mxu0 %v477
    %510 = vmatprep.subr.mxu0 0.0
    %511 = vmatpush1.msra.mxu0 %v478
    %512 = vmatprep.subr.mxu0 0.0
    %513 = vmatpush1.msra.mxu0 %v479
    %514 = vmatprep.subr.mxu0 0.0
    %515 = vmatpush1.msra.mxu0 %v480
    %516 = vmatprep.subr.mxu0 0.0
    %517 = vmatpush1.msra.mxu0 %v481
    %518 = vmatprep.subr.mxu0 0.0
    %519 = vmatpush1.msra.mxu0 %v482
    %520 = vmatprep.subr.mxu0 0.0
    %521 = vmatpush1.msra.mxu0 %v483
    %522 = vmatprep.subr.mxu0 0.0
    %523 = vmatpush1.msra.mxu0 %v484
    %524 = vmatprep.subr.mxu0 0.0
    %525 = vmatpush1.msra.mxu0 %v485
    %526 = vmatprep.subr.mxu0 0.0
    %527 = vmatpush1.msra.mxu0 0.0
    %528 = vmatprep.subr.mxu0 0.0
    %529 = vmatpush1.msra.mxu0 0.0
    %530 = vmatprep.subr.mxu0 0.0
    %531 = vmatpush1.msra.mxu0 0.0
    %532 = vmatprep.subr.mxu0 0.0
    %533 = vmatpush1.msra.mxu0 0.0
    %534 = vmatprep.subr.mxu0 0.0
    %535 = vmatpush1.msra.mxu0 0.0
    %536 = vmatprep.subr.mxu0 0.0
    %537 = vmatpush1.msra.mxu0 0.0
    %538 = vmatprep.subr.mxu0 0.0
    %539 = vmatpush1.msra.mxu0 0.0
    %540 = vmatprep.subr.mxu0 0.0
    %541 = vmatpush1.msra.mxu0 0.0
    %542 = vmatprep.subr.mxu0 0.0
    %543 = vmatpush1.msra.mxu0 0.0
    %544 = vmatprep.subr.mxu0 0.0
    %545 = vmatpush1.msra.mxu0 0.0
    %546 = vmatprep.subr.mxu0 0.0
    %547 = vmatpush1.msra.mxu0 0.0
    %548 = vmatprep.subr.mxu0 0.0
    %549 = vmatpush1.msra.mxu0 0.0
    %550 = vmatprep.subr.mxu0 0.0
    %551 = vmatpush1.msra.mxu0 0.0
    %552 = vmatprep.subr.mxu0 0.0
    %553 = vmatpush1.msra.mxu0 0.0
    %554 = vmatprep.subr.mxu0 0.0
    %555 = vmatpush1.msra.mxu0 0.0
    %556 = vmatprep.subr.mxu0 0.0
    %557 = vmatpush1.msra.mxu0 0.0
    %558 = vmatprep.mubr.f32.mxu0 0.0
    %559 = vmatmul.mubr.f32.gmra.mrb[0].mxu0 %v468
    %v560 = vpop.f32.mrb[0].mxu0
    %v561 = vadd.f32 %v492, %v560
    %v562 = vpop.f32.mrb[0].mxu0
    %563 = vdwg.mxu0
    %v564 = vmax.f32 %v561, 0.0
    %s565 = scalar_lea.vmem [#allocation7], 256
    %v566 = vld [vmem:[%s565] sm:$0xff]
    %v567 = vld [vmem:[%s565 + $0x8] sm:$0xff]
    %v568 = vld [vmem:[%s565 + $0x10] sm:$0xff]
    %v569 = vld [vmem:[%s565 + $0x18] sm:$0xff]
    %v570 = vld [vmem:[%s565 + $0x20] sm:$0xff]
    %v571 = vld [vmem:[%s565 + $0x28] sm:$0xff]
    %v572 = vld [vmem:[%s565 + $0x30] sm:$0xff]
    %v573 = vld [vmem:[%s565 + $0x38] sm:$0xff]
    %v574 = vld [vmem:[%s565 + $0x40] sm:$0xff]
    %v575 = vld [vmem:[%s565 + $0x48] sm:$0xff]
    %v576 = vld [vmem:[%s565 + $0x50] sm:$0xff]
    %v577 = vld [vmem:[%s565 + $0x58] sm:$0xff]
    %v578 = vld [vmem:[%s565 + $0x60] sm:$0xff]
    %v579 = vld [vmem:[%s565 + $0x68] sm:$0xff]
    %v580 = vld [vmem:[%s565 + $0x70] sm:$0xff]
    %v581 = vld [vmem:[%s565 + $0x78] sm:$0xff]
    %s582 = scalar_lea.vmem %s8, 2
    %v583 = vld [vmem:[%s582] sm:$0x1]
    %v585 = vlaneseq
    %v586 = vshrl.u32 %v585, 7
    %v587 = vsub.s32 0, %v586
    %v588 = vrot.slane %v583, %v587
    %590 = vmatprep.subr.mxu0 0.0
    %591 = vmatpush1.msra.mxu0 %v566
    %592 = vmatprep.subr.mxu0 0.0
    %593 = vmatpush1.msra.mxu0 %v567
    %594 = vmatprep.subr.mxu0 0.0
    %595 = vmatpush1.msra.mxu0 %v568
    %596 = vmatprep.subr.mxu0 0.0
    %597 = vmatpush1.msra.mxu0 %v569
    %598 = vmatprep.subr.mxu0 0.0
    %599 = vmatpush1.msra.mxu0 %v570
    %600 = vmatprep.subr.mxu0 0.0
    %601 = vmatpush1.msra.mxu0 %v571
    %602 = vmatprep.subr.mxu0 0.0
    %603 = vmatpush1.msra.mxu0 %v572
    %604 = vmatprep.subr.mxu0 0.0
    %605 = vmatpush1.msra.mxu0 %v573
    %606 = vmatprep.subr.mxu0 0.0
    %607 = vmatpush1.msra.mxu0 %v574
    %608 = vmatprep.subr.mxu0 0.0
    %609 = vmatpush1.msra.mxu0 %v575
    %610 = vmatprep.subr.mxu0 0.0
    %611 = vmatpush1.msra.mxu0 %v576
    %612 = vmatprep.subr.mxu0 0.0
    %613 = vmatpush1.msra.mxu0 %v577
    %614 = vmatprep.subr.mxu0 0.0
    %615 = vmatpush1.msra.mxu0 %v578
    %616 = vmatprep.subr.mxu0 0.0
    %617 = vmatpush1.msra.mxu0 %v579
    %618 = vmatprep.subr.mxu0 0.0
    %619 = vmatpush1.msra.mxu0 %v580
    %620 = vmatprep.subr.mxu0 0.0
    %621 = vmatpush1.msra.mxu0 %v581
    %622 = vmatprep.subr.mxu0 0.0
    %623 = vmatpush1.msra.mxu0 0.0
    %624 = vmatprep.subr.mxu0 0.0
    %625 = vmatpush1.msra.mxu0 0.0
    %626 = vmatprep.subr.mxu0 0.0
    %627 = vmatpush1.msra.mxu0 0.0
    %628 = vmatprep.subr.mxu0 0.0
    %629 = vmatpush1.msra.mxu0 0.0
    %630 = vmatprep.subr.mxu0 0.0
    %631 = vmatpush1.msra.mxu0 0.0
    %632 = vmatprep.subr.mxu0 0.0
    %633 = vmatpush1.msra.mxu0 0.0
    %634 = vmatprep.subr.mxu0 0.0
    %635 = vmatpush1.msra.mxu0 0.0
    %636 = vmatprep.subr.mxu0 0.0
    %637 = vmatpush1.msra.mxu0 0.0
    %638 = vmatprep.subr.mxu0 0.0
    %639 = vmatpush1.msra.mxu0 0.0
    %640 = vmatprep.subr.mxu0 0.0
    %641 = vmatpush1.msra.mxu0 0.0
    %642 = vmatprep.subr.mxu0 0.0
    %643 = vmatpush1.msra.mxu0 0.0
    %644 = vmatprep.subr.mxu0 0.0
    %645 = vmatpush1.msra.mxu0 0.0
    %646 = vmatprep.subr.mxu0 0.0
    %647 = vmatpush1.msra.mxu0 0.0
    %648 = vmatprep.subr.mxu0 0.0
    %649 = vmatpush1.msra.mxu0 0.0
    %650 = vmatprep.subr.mxu0 0.0
    %651 = vmatpush1.msra.mxu0 0.0
    %652 = vmatprep.subr.mxu0 0.0
    %653 = vmatpush1.msra.mxu0 0.0
    %654 = vmatprep.mubr.f32.mxu0 0.0
    %655 = vmatmul.mubr.f32.gmra.mrb[0].mxu0 %v564
    %v656 = vpop.f32.mrb[0].mxu0
    %v657 = vadd.f32 %v588, %v656
    %v658 = vpop.f32.mrb[0].mxu0
    %659 = vdwg.mxu0
    %v660 = vmax.f32 %v657, 0.0
    %s661 = scalar_lea.vmem [#allocation7], 384
    %v662 = vld [vmem:[%s661] sm:$0xff]
    %v663 = vld [vmem:[%s661 + $0x8] sm:$0xff]
    %v664 = vld [vmem:[%s661 + $0x10] sm:$0xff]
    %v665 = vld [vmem:[%s661 + $0x18] sm:$0xff]
    %v666 = vld [vmem:[%s661 + $0x20] sm:$0xff]
    %v667 = vld [vmem:[%s661 + $0x28] sm:$0xff]
    %v668 = vld [vmem:[%s661 + $0x30] sm:$0xff]
    %v669 = vld [vmem:[%s661 + $0x38] sm:$0xff]
    %v670 = vld [vmem:[%s661 + $0x40] sm:$0xff]
    %v671 = vld [vmem:[%s661 + $0x48] sm:$0xff]
    %v672 = vld [vmem:[%s661 + $0x50] sm:$0xff]
    %v673 = vld [vmem:[%s661 + $0x58] sm:$0xff]
    %v674 = vld [vmem:[%s661 + $0x60] sm:$0xff]
    %v675 = vld [vmem:[%s661 + $0x68] sm:$0xff]
    %v676 = vld [vmem:[%s661 + $0x70] sm:$0xff]
    %v677 = vld [vmem:[%s661 + $0x78] sm:$0xff]
    %s678 = scalar_lea.vmem %s8, 3
    %v679 = vld [vmem:[%s678] sm:$0x1]
    %v681 = vlaneseq
    %v682 = vshrl.u32 %v681, 7
    %v683 = vsub.s32 0, %v682
    %v684 = vrot.slane %v679, %v683
    %686 = vmatprep.subr.mxu0 0.0
    %687 = vmatpush1.msra.mxu0 %v662
    %688 = vmatprep.subr.mxu0 0.0
    %689 = vmatpush1.msra.mxu0 %v663
    %690 = vmatprep.subr.mxu0 0.0
    %691 = vmatpush1.msra.mxu0 %v664
    %692 = vmatprep.subr.mxu0 0.0
    %693 = vmatpush1.msra.mxu0 %v665
    %694 = vmatprep.subr.mxu0 0.0
    %695 = vmatpush1.msra.mxu0 %v666
    %696 = vmatprep.subr.mxu0 0.0
    %697 = vmatpush1.msra.mxu0 %v667
    %698 = vmatprep.subr.mxu0 0.0
    %699 = vmatpush1.msra.mxu0 %v668
    %700 = vmatprep.subr.mxu0 0.0
    %701 = vmatpush1.msra.mxu0 %v669
    %702 = vmatprep.subr.mxu0 0.0
    %703 = vmatpush1.msra.mxu0 %v670
    %704 = vmatprep.subr.mxu0 0.0
    %705 = vmatpush1.msra.mxu0 %v671
    %706 = vmatprep.subr.mxu0 0.0
    %707 = vmatpush1.msra.mxu0 %v672
    %708 = vmatprep.subr.mxu0 0.0
    %709 = vmatpush1.msra.mxu0 %v673
    %710 = vmatprep.subr.mxu0 0.0
    %711 = vmatpush1.msra.mxu0 %v674
    %712 = vmatprep.subr.mxu0 0.0
    %713 = vmatpush1.msra.mxu0 %v675
    %714 = vmatprep.subr.mxu0 0.0
    %715 = vmatpush1.msra.mxu0 %v676
    %716 = vmatprep.subr.mxu0 0.0
    %717 = vmatpush1.msra.mxu0 %v677
    %718 = vmatprep.subr.mxu0 0.0
    %719 = vmatpush1.msra.mxu0 0.0
    %720 = vmatprep.subr.mxu0 0.0
    %721 = vmatpush1.msra.mxu0 0.0
    %722 = vmatprep.subr.mxu0 0.0
    %723 = vmatpush1.msra.mxu0 0.0
    %724 = vmatprep.subr.mxu0 0.0
    %725 = vmatpush1.msra.mxu0 0.0
    %726 = vmatprep.subr.mxu0 0.0
    %727 = vmatpush1.msra.mxu0 0.0
    %728 = vmatprep.subr.mxu0 0.0
    %729 = vmatpush1.msra.mxu0 0.0
    %730 = vmatprep.subr.mxu0 0.0
    %731 = vmatpush1.msra.mxu0 0.0
    %732 = vmatprep.subr.mxu0 0.0
    %733 = vmatpush1.msra.mxu0 0.0
    %734 = vmatprep.subr.mxu0 0.0
    %735 = vmatpush1.msra.mxu0 0.0
    %736 = vmatprep.subr.mxu0 0.0
    %737 = vmatpush1.msra.mxu0 0.0
    %738 = vmatprep.subr.mxu0 0.0
    %739 = vmatpush1.msra.mxu0 0.0
    %740 = vmatprep.subr.mxu0 0.0
    %741 = vmatpush1.msra.mxu0 0.0
    %742 = vmatprep.subr.mxu0 0.0
    %743 = vmatpush1.msra.mxu0 0.0
    %744 = vmatprep.subr.mxu0 0.0
    %745 = vmatpush1.msra.mxu0 0.0
    %746 = vmatprep.subr.mxu0 0.0
    %747 = vmatpush1.msra.mxu0 0.0
    %748 = vmatprep.subr.mxu0 0.0
    %749 = vmatpush1.msra.mxu0 0.0
    %750 = vmatprep.mubr.f32.mxu0 0.0
    %751 = vmatmul.mubr.f32.gmra.mrb[0].mxu0 %v660
    %v752 = vpop.f32.mrb[0].mxu0
    %v753 = vadd.f32 %v684, %v752
    %v754 = vpop.f32.mrb[0].mxu0
    %755 = vdwg.mxu0
    %756 = vst [vmem:[#allocation8] sm:$0xff] %v753
    // Predicated region
    $region50: #{deepq_forward.1} parent=1 // pred_check
      _
    $region51: #{deepq_forward.1} parent=1 // pred_check_branch
      %758 = sbr.rel (0) target = $region53
    $region52: #{deepq_forward.1} parent=1 // pred_region
      %s760 = ssub.s32 128, 128
      %761 = vsyncadd [#allocation4], %s760
      %s763 = sshll.u32 [#allocation8], 4
      %s764 = int_to_ptr.vmem [resolvable:$true] %s763
      %766 = dma.vmem_to_hbm [thread:$0]  %s764, 128, %s9, [#allocation4]
    $region53: #{deepq_forward.1} parent=1 // pred_fallthru
      _
    // Predicated region
    $region54: #{deepq_forward.1} parent=1 // pred_check
      _
    $region55: #{deepq_forward.1} parent=1 // pred_check_branch
      %768 = sbr.rel (0) target = $region57
    $region56: #{deepq_forward.1} parent=1 // pred_region
      %769 = dma.done [#allocation4], 128
    $region57: #{deepq_forward.1} parent=1 // pred_fallthru
      _
    %770 = vsyncpa [#allocation3], 1
    %771 = vsyncpa [#allocation6], 1
    %772 = vsyncpa [#allocation4], 1

</llo_original>
